<compile_context>
chip_gen: v7x
topology: tpu7x:2x2x1
jax: 0.10.0
libtpu: 0.0.40
codegen_flags: <defaults>
</compile_context>

<pallas_src>
import functools

import jax
import jax.numpy as jnp
import numpy as np
from jax import lax
from jax.experimental import pallas as pl
from jax.experimental.pallas import tpu as pltpu

BN_EPS = 1e-5


def _conv_slab(h, w_stacked, b, left_ok, right_ok):
    """3-tap 'same' Conv1d over the whole (C, Lp) slab as one MXU matmul.

    h         : (C, Lp)  f32   activation slab (batch*length on lanes)
    w_stacked : (C, 3C)  f32   [W_tap0 | W_tap1 | W_tap2]
    b         : (C, 1)   f32
    left_ok   : (1, Lp)  f32   1.0 where x[t-1] exists inside the same example
    right_ok  : (1, Lp)  f32   1.0 where x[t+1] exists inside the same example
    """
    Lp = h.shape[-1]
    h_prev = pltpu.roll(h, shift=1, axis=1) * left_ok        # x[t-1]
    h_next = pltpu.roll(h, shift=Lp - 1, axis=1) * right_ok  # x[t+1]
    x_stacked = jnp.concatenate([h_prev, h, h_next], axis=0)  # (3C, Lp)
    return jnp.dot(w_stacked, x_stacked,
                   preferred_element_type=jnp.float32) + b


def residual_block_kernel(x_ref, w1_ref, b1_ref, w2_ref, b2_ref,
                          g_ref, be_ref, w3_ref, b3_ref, o_ref, *, L, NL):
    Lp = x_ref.shape[-1]
    x = x_ref[...].astype(jnp.float32)                        # (C, Lp)

    # Per-lane masks: lanes are [ex0 pos0..L-1 | ex1 pos0..L-1 | ... | pad].
    lane = lax.broadcasted_iota(jnp.int32, (1, Lp), 1)
    pos = lane % L
    valid = lane < NL
    valid_f = jnp.where(valid, 1.0, 0.0)
    left_ok = jnp.where(jnp.logical_and(valid, pos != 0), 1.0, 0.0)
    right_ok = jnp.where(jnp.logical_and(valid, pos != L - 1), 1.0, 0.0)

    # conv1 -> conv2
    y = _conv_slab(x, w1_ref[...], b1_ref[...], left_ok, right_ok)
    y = _conv_slab(y, w2_ref[...], b2_ref[...], left_ok, right_ok)
    y = y * valid_f                 # zero pad lanes (bias leaked into them)

    # BatchNorm1d, training-mode batch statistics, single reduction pass.
    inv_cnt = 1.0 / float(NL)
    mean = jnp.sum(y, axis=1, keepdims=True) * inv_cnt         # (C, 1)
    ex2 = jnp.sum(y * y, axis=1, keepdims=True) * inv_cnt      # (C, 1)
    var = ex2 - mean * mean                                    # biased variance
    scale = g_ref[...] * lax.rsqrt(var + BN_EPS)               # (C, 1)
    shift = be_ref[...] - mean * scale                         # (C, 1)

    # Swish: h * sigmoid(h)   (EUP exp + EUP approx reciprocal, no VALU divide)
    h = y * scale + shift
    h = h * pl.reciprocal(1.0 + jnp.exp(-h), approx=True)

    # conv3 -> 0.1-scaled residual.  Pad lanes never leak into valid lanes
    # because left_ok/right_ok cut every example (and the pad) boundary.
    y3 = _conv_slab(h, w3_ref[...], b3_ref[...], left_ok, right_ok)
    o_ref[...] = (x + 0.1 * y3).astype(o_ref.dtype)


def residual_block(x, w1, b1, w2, b2, gamma, beta, w3, b3):
    """x: (N, C, L).  w*: (C, C, 3) PyTorch Conv1d layout.  b*, gamma, beta: (C,)."""
    N, C, L = x.shape
    NL = N * L
    Lp = ((NL + 127) // 128) * 128               # lane-dense last dimension

    def stack_w(w):                               # (C, C, 3) -> (C, 3C), tap-major blocks
        w = w.astype(jnp.float32)
        return jnp.concatenate([w[:, :, 0], w[:, :, 1], w[:, :, 2]], axis=1)

    def col(v):
        return v.reshape(C, 1).astype(jnp.float32)

    # (N, C, L) -> (C, N*L) slab, zero-padded to Lp lanes.
    x_slab = jnp.transpose(x, (1, 0, 2)).reshape(C, NL).astype(jnp.float32)
    x_slab = jnp.pad(x_slab, ((0, 0), (0, Lp - NL)))

    vmem = pl.BlockSpec(memory_space=pltpu.MemorySpace.VMEM)
    out = pl.pallas_call(
        functools.partial(residual_block_kernel, L=L, NL=NL),
        out_shape=jax.ShapeDtypeStruct((C, Lp), jnp.float32),
        in_specs=[vmem] * 9,
        out_specs=vmem,
    )(x_slab, stack_w(w1), col(b1), stack_w(w2), col(b2),
      col(gamma), col(beta), stack_w(w3), col(b3))

    out = out[:, :NL].reshape(C, N, L)
    return jnp.transpose(out, (1, 0, 2)).astype(x.dtype)


# ---------------------- pure-JAX reference ----------------------
def ref_forward(x, w1, b1, w2, b2, gamma, beta, w3, b3):
    def conv(h, w, b):
        out = lax.conv_general_dilated(
            h, w, window_strides=(1,), padding=((1, 1),),
            dimension_numbers=("NCH", "OIH", "NCH"))
        return out + b.reshape(1, -1, 1)

    y = conv(x, w1, b1)
    y = conv(y, w2, b2)
    mean = jnp.mean(y, axis=(0, 2), keepdims=True)
    var = jnp.mean((y - mean) ** 2, axis=(0, 2), keepdims=True)
    y = (y - mean) * lax.rsqrt(var + BN_EPS)
    y = y * gamma.reshape(1, -1, 1) + beta.reshape(1, -1, 1)
    y = y * jax.nn.sigmoid(y)
    y = conv(y, w3, b3)
    return x + 0.1 * y


if __name__ == "__main__":
    N, dim, L = 2, 4, 16
    key = jax.random.PRNGKey(0)
    kx, kw1, kb1, kw2, kb2, kw3, kb3 = jax.random.split(key, 7)

    bound = 1.0 / np.sqrt(dim * 3)   # PyTorch Conv1d default init range
    x = jax.random.normal(kx, (N, dim, L), dtype=jnp.float32)
    w1 = jax.random.uniform(kw1, (dim, dim, 3), jnp.float32, -bound, bound)
    b1 = jax.random.uniform(kb1, (dim,), jnp.float32, -bound, bound)
    w2 = jax.random.uniform(kw2, (dim, dim, 3), jnp.float32, -bound, bound)
    b2 = jax.random.uniform(kb2, (dim,), jnp.float32, -bound, bound)
    w3 = jax.random.uniform(kw3, (dim, dim, 3), jnp.float32, -bound, bound)
    b3 = jax.random.uniform(kb3, (dim,), jnp.float32, -bound, bound)
    gamma = jnp.ones((dim,), jnp.float32)   # BatchNorm1d default weight
    beta = jnp.zeros((dim,), jnp.float32)   # BatchNorm1d default bias

    out = residual_block(x, w1, b1, w2, b2, gamma, beta, w3, b3)
    out = jax.block_until_ready(out)

    ref = ref_forward(x, w1, b1, w2, b2, gamma, beta, w3, b3)
    # Tolerance allows the EUP approx reciprocal used for the Swish sigmoid.
    np.testing.assert_allclose(np.asarray(out), np.asarray(ref),
                               rtol=2e-3, atol=2e-3)
    print("KERNEL_OK")
</pallas_src>

<mosaic_0001>
module attributes {stable_mosaic.version = 11 : i64} {
  func.func @residual_block_kernel(%arg0: memref<4x128xf32, #tpu.memory_space<vmem>>, %arg1: memref<4x12xf32, #tpu.memory_space<vmem>>, %arg2: memref<4x1xf32, #tpu.memory_space<vmem>>, %arg3: memref<4x12xf32, #tpu.memory_space<vmem>>, %arg4: memref<4x1xf32, #tpu.memory_space<vmem>>, %arg5: memref<4x1xf32, #tpu.memory_space<vmem>>, %arg6: memref<4x1xf32, #tpu.memory_space<vmem>>, %arg7: memref<4x12xf32, #tpu.memory_space<vmem>>, %arg8: memref<4x1xf32, #tpu.memory_space<vmem>>, %arg9: memref<4x128xf32, #tpu.memory_space<vmem>>) attributes {dimension_semantics = [], scalar_prefetch = 0 : i64, scratch_operands = 0 : i64, tpu.core_type = #tpu.core_type<tc>} {
    %c0 = arith.constant 0 : index
    %c0_0 = arith.constant 0 : index
    %0 = vector.load %arg0[%c0, %c0_0] : memref<4x128xf32, #tpu.memory_space<vmem>>, vector<4x128xf32>
    %1 = tpu.iota {dimensions = array<i32: 1>} : vector<1x128xi32>
    %c16_i32 = arith.constant 16 : i32
    %c0_i32 = arith.constant 0 : i32
    %2 = arith.cmpi eq, %c16_i32, %c0_i32 : i32
    %c1_i32 = arith.constant 1 : i32
    %3 = arith.select %2, %c1_i32, %c16_i32 : i32
    %4 = vector.broadcast %3 : i32 to vector<1x128xi32>
    %5 = arith.remsi %1, %4 : vector<1x128xi32>
    %c0_i32_1 = arith.constant 0 : i32
    %6 = vector.broadcast %c0_i32_1 : i32 to vector<1x128xi32>
    %7 = arith.cmpi ne, %5, %6 : vector<1x128xi32>
    %c0_i32_2 = arith.constant 0 : i32
    %8 = vector.broadcast %c0_i32_2 : i32 to vector<1x128xi32>
    %9 = arith.cmpi slt, %5, %8 : vector<1x128xi32>
    %c0_i32_3 = arith.constant 0 : i32
    %10 = arith.cmpi slt, %3, %c0_i32_3 : i32
    %11 = vector.broadcast %10 : i1 to vector<1x128xi1>
    %12 = vector.broadcast %11 : vector<1x128xi1> to vector<1x128xi1>
    %13 = arith.xori %9, %12 : vector<1x128xi1>
    %14 = arith.andi %13, %7 : vector<1x128xi1>
    %15 = vector.broadcast %3 : i32 to vector<1x128xi32>
    %16 = arith.addi %5, %15 : vector<1x128xi32>
    %17 = arith.select %14, %16, %5 : vector<1x128xi1>, vector<1x128xi32>
    %c32_i32 = arith.constant 32 : i32
    %18 = vector.broadcast %c32_i32 : i32 to vector<1x128xi32>
    %19 = arith.cmpi slt, %1, %18 : vector<1x128xi32>
    %cst = arith.constant 1.000000e+00 : f32
    %cst_4 = arith.constant 0.000000e+00 : f32
    %20 = vector.broadcast %cst : f32 to vector<1x128xf32>
    %21 = vector.broadcast %cst_4 : f32 to vector<1x128xf32>
    %22 = arith.select %19, %20, %21 : vector<1x128xi1>, vector<1x128xf32>
    %c0_i32_5 = arith.constant 0 : i32
    %23 = vector.broadcast %c0_i32_5 : i32 to vector<1x128xi32>
    %24 = arith.cmpi ne, %17, %23 : vector<1x128xi32>
    %25 = arith.andi %19, %24 : vector<1x128xi1>
    %cst_6 = arith.constant 1.000000e+00 : f32
    %cst_7 = arith.constant 0.000000e+00 : f32
    %26 = vector.broadcast %cst_6 : f32 to vector<1x128xf32>
    %27 = vector.broadcast %cst_7 : f32 to vector<1x128xf32>
    %28 = arith.select %25, %26, %27 : vector<1x128xi1>, vector<1x128xf32>
    %c15_i32 = arith.constant 15 : i32
    %29 = vector.broadcast %c15_i32 : i32 to vector<1x128xi32>
    %30 = arith.cmpi ne, %17, %29 : vector<1x128xi32>
    %31 = arith.andi %19, %30 : vector<1x128xi1>
    %cst_8 = arith.constant 1.000000e+00 : f32
    %cst_9 = arith.constant 0.000000e+00 : f32
    %32 = vector.broadcast %cst_8 : f32 to vector<1x128xf32>
    %33 = vector.broadcast %cst_9 : f32 to vector<1x128xf32>
    %34 = arith.select %31, %32, %33 : vector<1x128xi1>, vector<1x128xf32>
    %c0_10 = arith.constant 0 : index
    %c0_11 = arith.constant 0 : index
    %35 = vector.load %arg1[%c0_10, %c0_11] : memref<4x12xf32, #tpu.memory_space<vmem>>, vector<4x12xf32>
    %c0_12 = arith.constant 0 : index
    %c0_13 = arith.constant 0 : index
    %36 = vector.load %arg2[%c0_12, %c0_13] : memref<4x1xf32, #tpu.memory_space<vmem>>, vector<4x1xf32>
    %c1_i32_14 = arith.constant 1 : i32
    %37 = tpu.dynamic_rotate %0 by %c1_i32_14 dim 1 : vector<4x128xf32>, i32 -> vector<4x128xf32>
    %38 = vector.broadcast %28 : vector<1x128xf32> to vector<4x128xf32>
    %39 = arith.mulf %37, %38 : vector<4x128xf32>
    %c127_i32 = arith.constant 127 : i32
    %40 = tpu.dynamic_rotate %0 by %c127_i32 dim 1 : vector<4x128xf32>, i32 -> vector<4x128xf32>
    %41 = vector.broadcast %34 : vector<1x128xf32> to vector<4x128xf32>
    %42 = arith.mulf %40, %41 : vector<4x128xf32>
    %43 = tpu.concatenate %39, %0, %42 in 0 : vector<4x128xf32>, vector<4x128xf32>, vector<4x128xf32> -> vector<12x128xf32>
    %cst_15 = arith.constant dense<0.000000e+00> : vector<4x128xf32>
    %44 = tpu.matmul %35, %43, %cst_15 {dimension_numbers = #tpu.dot_dimension_numbers<[1], [0], [0], [1], [0, 0, 1, 1], [], []>} : vector<4x12xf32>, vector<12x128xf32>, vector<4x128xf32> -> vector<4x128xf32>
    %45 = vector.broadcast %36 : vector<4x1xf32> to vector<4x128xf32>
    %46 = arith.addf %44, %45 : vector<4x128xf32>
    %c0_16 = arith.constant 0 : index
    %c0_17 = arith.constant 0 : index
    %47 = vector.load %arg3[%c0_16, %c0_17] : memref<4x12xf32, #tpu.memory_space<vmem>>, vector<4x12xf32>
    %c0_18 = arith.constant 0 : index
    %c0_19 = arith.constant 0 : index
    %48 = vector.load %arg4[%c0_18, %c0_19] : memref<4x1xf32, #tpu.memory_space<vmem>>, vector<4x1xf32>
    %c1_i32_20 = arith.constant 1 : i32
    %49 = tpu.dynamic_rotate %46 by %c1_i32_20 dim 1 : vector<4x128xf32>, i32 -> vector<4x128xf32>
    %50 = vector.broadcast %28 : vector<1x128xf32> to vector<4x128xf32>
    %51 = arith.mulf %49, %50 : vector<4x128xf32>
    %c127_i32_21 = arith.constant 127 : i32
    %52 = tpu.dynamic_rotate %46 by %c127_i32_21 dim 1 : vector<4x128xf32>, i32 -> vector<4x128xf32>
    %53 = vector.broadcast %34 : vector<1x128xf32> to vector<4x128xf32>
    %54 = arith.mulf %52, %53 : vector<4x128xf32>
    %55 = tpu.concatenate %51, %46, %54 in 0 : vector<4x128xf32>, vector<4x128xf32>, vector<4x128xf32> -> vector<12x128xf32>
    %cst_22 = arith.constant dense<0.000000e+00> : vector<4x128xf32>
    %56 = tpu.matmul %47, %55, %cst_22 {dimension_numbers = #tpu.dot_dimension_numbers<[1], [0], [0], [1], [0, 0, 1, 1], [], []>} : vector<4x12xf32>, vector<12x128xf32>, vector<4x128xf32> -> vector<4x128xf32>
    %57 = vector.broadcast %48 : vector<4x1xf32> to vector<4x128xf32>
    %58 = arith.addf %56, %57 : vector<4x128xf32>
    %59 = vector.broadcast %22 : vector<1x128xf32> to vector<4x128xf32>
    %60 = arith.mulf %58, %59 : vector<4x128xf32>
    %cst_23 = arith.constant dense<0.000000e+00> : vector<4xf32>
    %61 = vector.multi_reduction <add>, %60, %cst_23 [1] : vector<4x128xf32> to vector<4xf32>
    %62 = vector.shape_cast %61 : vector<4xf32> to vector<4x1xf32>
    %cst_24 = arith.constant 3.125000e-02 : f32
    %63 = vector.broadcast %cst_24 : f32 to vector<4x1xf32>
    %64 = arith.mulf %62, %63 : vector<4x1xf32>
    %65 = arith.mulf %60, %60 : vector<4x128xf32>
    %cst_25 = arith.constant dense<0.000000e+00> : vector<4xf32>
    %66 = vector.multi_reduction <add>, %65, %cst_25 [1] : vector<4x128xf32> to vector<4xf32>
    %67 = vector.shape_cast %66 : vector<4xf32> to vector<4x1xf32>
    %cst_26 = arith.constant 3.125000e-02 : f32
    %68 = vector.broadcast %cst_26 : f32 to vector<4x1xf32>
    %69 = arith.mulf %67, %68 : vector<4x1xf32>
    %70 = arith.mulf %64, %64 : vector<4x1xf32>
    %71 = arith.subf %69, %70 : vector<4x1xf32>
    %c0_27 = arith.constant 0 : index
    %c0_28 = arith.constant 0 : index
    %72 = vector.load %arg5[%c0_27, %c0_28] : memref<4x1xf32, #tpu.memory_space<vmem>>, vector<4x1xf32>
    %cst_29 = arith.constant 9.99999974E-6 : f32
    %73 = vector.broadcast %cst_29 : f32 to vector<4x1xf32>
    %74 = arith.addf %71, %73 : vector<4x1xf32>
    %75 = math.rsqrt %74 : vector<4x1xf32>
    %76 = arith.mulf %72, %75 : vector<4x1xf32>
    %c0_30 = arith.constant 0 : index
    %c0_31 = arith.constant 0 : index
    %77 = vector.load %arg6[%c0_30, %c0_31] : memref<4x1xf32, #tpu.memory_space<vmem>>, vector<4x1xf32>
    %78 = arith.mulf %64, %76 : vector<4x1xf32>
    %79 = arith.subf %77, %78 : vector<4x1xf32>
    %80 = vector.broadcast %76 : vector<4x1xf32> to vector<4x128xf32>
    %81 = arith.mulf %60, %80 : vector<4x128xf32>
    %82 = vector.broadcast %79 : vector<4x1xf32> to vector<4x128xf32>
    %83 = arith.addf %81, %82 : vector<4x128xf32>
    %cst_32 = arith.constant 0.000000e+00 : f32
    %84 = vector.broadcast %cst_32 : f32 to vector<4x128xf32>
    %85 = arith.subf %84, %83 : vector<4x128xf32>
    %86 = math.exp %85 : vector<4x128xf32>
    %cst_33 = arith.constant 1.000000e+00 : f32
    %87 = vector.broadcast %cst_33 : f32 to vector<4x128xf32>
    %88 = arith.addf %87, %86 : vector<4x128xf32>
    %89 = tpu.reciprocal %88 {approx = true} : vector<4x128xf32> -> vector<4x128xf32>
    %90 = arith.mulf %83, %89 : vector<4x128xf32>
    %c0_34 = arith.constant 0 : index
    %c0_35 = arith.constant 0 : index
    %91 = vector.load %arg7[%c0_34, %c0_35] : memref<4x12xf32, #tpu.memory_space<vmem>>, vector<4x12xf32>
    %c0_36 = arith.constant 0 : index
    %c0_37 = arith.constant 0 : index
    %92 = vector.load %arg8[%c0_36, %c0_37] : memref<4x1xf32, #tpu.memory_space<vmem>>, vector<4x1xf32>
    %c1_i32_38 = arith.constant 1 : i32
    %93 = tpu.dynamic_rotate %90 by %c1_i32_38 dim 1 : vector<4x128xf32>, i32 -> vector<4x128xf32>
    %94 = vector.broadcast %28 : vector<1x128xf32> to vector<4x128xf32>
    %95 = arith.mulf %93, %94 : vector<4x128xf32>
    %c127_i32_39 = arith.constant 127 : i32
    %96 = tpu.dynamic_rotate %90 by %c127_i32_39 dim 1 : vector<4x128xf32>, i32 -> vector<4x128xf32>
    %97 = vector.broadcast %34 : vector<1x128xf32> to vector<4x128xf32>
    %98 = arith.mulf %96, %97 : vector<4x128xf32>
    %99 = tpu.concatenate %95, %90, %98 in 0 : vector<4x128xf32>, vector<4x128xf32>, vector<4x128xf32> -> vector<12x128xf32>
    %cst_40 = arith.constant dense<0.000000e+00> : vector<4x128xf32>
    %100 = tpu.matmul %91, %99, %cst_40 {dimension_numbers = #tpu.dot_dimension_numbers<[1], [0], [0], [1], [0, 0, 1, 1], [], []>} : vector<4x12xf32>, vector<12x128xf32>, vector<4x128xf32> -> vector<4x128xf32>
    %101 = vector.broadcast %92 : vector<4x1xf32> to vector<4x128xf32>
    %102 = arith.addf %100, %101 : vector<4x128xf32>
    %cst_41 = arith.constant 1.000000e-01 : f32
    %103 = vector.broadcast %cst_41 : f32 to vector<4x128xf32>
    %104 = arith.mulf %103, %102 : vector<4x128xf32>
    %105 = arith.addf %0, %104 : vector<4x128xf32>
    %c0_42 = arith.constant 0 : index
    %c0_43 = arith.constant 0 : index
    %106 = vector.load %arg9[%c0_42, %c0_43] : memref<4x128xf32, #tpu.memory_space<vmem>>, vector<4x128xf32>
    tpu.vector_store %arg9[%c0_42, %c0_43], %105 {strides = array<i32>} : memref<4x128xf32, #tpu.memory_space<vmem>>, vector<4x128xf32>,
    return
  }
}

</mosaic_0001>

<llo_original>
// kernel: tpu_custom_call.1
$region0: #{tpu_custom_call.1}
  #allocation0 [shape = 'u32[]', space=smem, size = 0x4, offset = 0x4, fixed_abs, tag = 'smem constant byte address 0x4 - core index']
  #allocation1 [shape = 'u32[144,128]{1,0:T(1,128)}', space=vmem, size = 0x12000, scoped, tag = 'internal scratch']
  %s0 = inlined_call_operand.vmem [shape: f32[4,128], index: 0, kind: input, shape index: {}]
  %s1 = inlined_call_operand.vmem [shape: f32[4,12], index: 1, kind: input, shape index: {}]
  %s2 = inlined_call_operand.vmem [shape: f32[4,1], index: 2, kind: input, shape index: {}]
  %s3 = inlined_call_operand.vmem [shape: f32[4,12], index: 3, kind: input, shape index: {}]
  %s4 = inlined_call_operand.vmem [shape: f32[4,1], index: 4, kind: input, shape index: {}]
  %s5 = inlined_call_operand.vmem [shape: f32[4,1], index: 5, kind: input, shape index: {}]
  %s6 = inlined_call_operand.vmem [shape: f32[4,1], index: 6, kind: input, shape index: {}]
  %s7 = inlined_call_operand.vmem [shape: f32[4,12], index: 7, kind: input, shape index: {}]
  %s8 = inlined_call_operand.vmem [shape: f32[4,1], index: 8, kind: input, shape index: {}]
  %s9 = inlined_call_operand.hbm [shape: f32[4,128], index: 9, kind: output, shape index: {}]
  %s10 = sld [smem:[#allocation0]]
  $region46: #{tpu_custom_call.1} parent=0
    _
  %s12 = ssub.s32 1, %s10
  %s13 = scalar_select 0, %s12, %s10
  $region1: #{tpu_custom_call.1} parent=0
    #allocation2 [shape = 'u8[2048]{0}', space=vmem, size = 0x800, scoped, tag = 'output window, operand 0, single buffered']
    #allocation3 [shape = 's32[1]{0}', space=sflag, size = 0x4, scoped, tag = 'scoped memory for tpu_custom_call.1']
    %14 = vsyncpa [#allocation3], 0
    // Predicated region
    $region2: #{tpu_custom_call.1} parent=1 // pred_check
      _
    $region3: #{tpu_custom_call.1} parent=1 // pred_check_branch
      %16 = sbr.rel (0) target = $region5
    $region4: #{tpu_custom_call.1} parent=1 // pred_region
      _
    $region5: #{tpu_custom_call.1} parent=1 // pred_fallthru
      _
    // Predicated region
    $region6: #{tpu_custom_call.1} parent=1 // pred_check
      _
    $region7: #{tpu_custom_call.1} parent=1 // pred_check_branch
      %18 = sbr.rel (0) target = $region9
    $region8: #{tpu_custom_call.1} parent=1 // pred_region
      _
    $region9: #{tpu_custom_call.1} parent=1 // pred_fallthru
      _
    // Predicated region
    $region10: #{tpu_custom_call.1} parent=1 // pred_check
      _
    $region11: #{tpu_custom_call.1} parent=1 // pred_check_branch
      %20 = sbr.rel (0) target = $region13
    $region12: #{tpu_custom_call.1} parent=1 // pred_region
      _
    $region13: #{tpu_custom_call.1} parent=1 // pred_fallthru
      _
    // Predicated region
    $region14: #{tpu_custom_call.1} parent=1 // pred_check
      _
    $region15: #{tpu_custom_call.1} parent=1 // pred_check_branch
      %22 = sbr.rel (0) target = $region17
    $region16: #{tpu_custom_call.1} parent=1 // pred_region
      _
    $region17: #{tpu_custom_call.1} parent=1 // pred_fallthru
      _
    // Predicated region
    $region18: #{tpu_custom_call.1} parent=1 // pred_check
      _
    $region19: #{tpu_custom_call.1} parent=1 // pred_check_branch
      %24 = sbr.rel (0) target = $region21
    $region20: #{tpu_custom_call.1} parent=1 // pred_region
      _
    $region21: #{tpu_custom_call.1} parent=1 // pred_fallthru
      _
    // Predicated region
    $region22: #{tpu_custom_call.1} parent=1 // pred_check
      _
    $region23: #{tpu_custom_call.1} parent=1 // pred_check_branch
      %26 = sbr.rel (0) target = $region25
    $region24: #{tpu_custom_call.1} parent=1 // pred_region
      _
    $region25: #{tpu_custom_call.1} parent=1 // pred_fallthru
      _
    // Predicated region
    $region26: #{tpu_custom_call.1} parent=1 // pred_check
      _
    $region27: #{tpu_custom_call.1} parent=1 // pred_check_branch
      %28 = sbr.rel (0) target = $region29
    $region28: #{tpu_custom_call.1} parent=1 // pred_region
      _
    $region29: #{tpu_custom_call.1} parent=1 // pred_fallthru
      _
    // Predicated region
    $region30: #{tpu_custom_call.1} parent=1 // pred_check
      _
    $region31: #{tpu_custom_call.1} parent=1 // pred_check_branch
      %30 = sbr.rel (0) target = $region33
    $region32: #{tpu_custom_call.1} parent=1 // pred_region
      _
    $region33: #{tpu_custom_call.1} parent=1 // pred_fallthru
      _
    // Predicated region
    $region34: #{tpu_custom_call.1} parent=1 // pred_check
      _
    $region35: #{tpu_custom_call.1} parent=1 // pred_check_branch
      %32 = sbr.rel (0) target = $region37
    $region36: #{tpu_custom_call.1} parent=1 // pred_region
      _
    $region37: #{tpu_custom_call.1} parent=1 // pred_fallthru
      _
    %v33 = vld [vmem:[%s0] sm:$0xf]
    %v34 = vlaneseq
    %v35 = vand.u32 %v34, 127
    %vm36 = vcmp.lt.s32.totalorder %v35, 0
    %v37 = vsub.s32 0, %v35
    %v38 = vsel %vm36, %v37, %v35
    %v39 = vshrl.u32 %v38, 4
    %v40 = vand.u32 %v38, 15
    %v41 = vsub.s32 0, %v40
    %v42 = vsel %vm36, %v41, %v40
    %vm43 = vcmp.ne.s32.totalorder %v42, 0
    %vm44 = vcmp.lt.s32.totalorder %v42, 0
    %vm45 = vmand %vm44, %vm43
    %v46 = vadd.s32 %v42, 16
    %v47 = vsel %vm45, %v46, %v42
    %vm48 = vcmp.lt.s32.totalorder %v35, 32
    %v49 = vsel %vm48, 1.0, 0.0
    %vm50 = vcmp.ne.s32.totalorder %v47, 0
    %vm51 = vmand %vm48, %vm50
    %v52 = vsel %vm51, 1.0, 0.0
    %vm53 = vcmp.ne.s32.totalorder %v47, 15
    %vm54 = vmand %vm48, %vm53
    %v55 = vsel %vm54, 1.0, 0.0
    %v56 = vld [vmem:[%s1] sm:$0xf]
    %v57 = vld [vmem:[%s2] sm:$0xf]
    %58 = vrot.lane.b32.xlu0 %v33, 1
    %v59 = vpop.permute.xlu0 %58
    %v60 = vmul.f32 %v59, %v52
    %61 = vrot.lane.b32.xlu0 %v33, 127
    %v62 = vpop.permute.xlu0 %61
    %v63 = vmul.f32 %v62, %v55
    %v65 = vrot.slane %v33, 4
    %vm67 = vcmask 1043456
    %v68 = vsel %vm67, %v60, %v65
    %70 = vset.pattern.permute.xlu0 0
    %71 = vperm.xlu0 %70, %v57
    %v72 = vpop.permute.xlu0 %71
    %vm74 = vcmask 97280
    %v76 = vsel %vm74, %v56, 0
    %v79 = vsel %vm67, %v63, 0
    %81 = vmatprep.subr.mxu0 0.0
    %82 = vmatpush1.msra.mxu0 %v68
    %83 = vmatprep.subr.mxu0 0.0
    %84 = vmatpush1.msra.mxu0 %v79
    %85 = vmatprep.subr.mxu0 0.0
    %86 = vmatpush1.msra.mxu0 0.0
    %87 = vmatprep.subr.mxu0 0.0
    %88 = vmatpush1.msra.mxu0 0.0
    %89 = vmatprep.subr.mxu0 0.0
    %90 = vmatpush1.msra.mxu0 0.0
    %91 = vmatprep.subr.mxu0 0.0
    %92 = vmatpush1.msra.mxu0 0.0
    %93 = vmatprep.subr.mxu0 0.0
    %94 = vmatpush1.msra.mxu0 0.0
    %95 = vmatprep.subr.mxu0 0.0
    %96 = vmatpush1.msra.mxu0 0.0
    %97 = vmatprep.subr.mxu0 0.0
    %98 = vmatpush1.msra.mxu0 0.0
    %99 = vmatprep.subr.mxu0 0.0
    %100 = vmatpush1.msra.mxu0 0.0
    %101 = vmatprep.subr.mxu0 0.0
    %102 = vmatpush1.msra.mxu0 0.0
    %103 = vmatprep.subr.mxu0 0.0
    %104 = vmatpush1.msra.mxu0 0.0
    %105 = vmatprep.subr.mxu0 0.0
    %106 = vmatpush1.msra.mxu0 0.0
    %107 = vmatprep.subr.mxu0 0.0
    %108 = vmatpush1.msra.mxu0 0.0
    %109 = vmatprep.subr.mxu0 0.0
    %110 = vmatpush1.msra.mxu0 0.0
    %111 = vmatprep.subr.mxu0 0.0
    %112 = vmatpush1.msra.mxu0 0.0
    %113 = vmatprep.subr.mxu0 0.0
    %114 = vmatpush1.msra.mxu0 0.0
    %115 = vmatprep.subr.mxu0 0.0
    %116 = vmatpush1.msra.mxu0 0.0
    %117 = vmatprep.subr.mxu0 0.0
    %118 = vmatpush1.msra.mxu0 0.0
    %119 = vmatprep.subr.mxu0 0.0
    %120 = vmatpush1.msra.mxu0 0.0
    %121 = vmatprep.subr.mxu0 0.0
    %122 = vmatpush1.msra.mxu0 0.0
    %123 = vmatprep.subr.mxu0 0.0
    %124 = vmatpush1.msra.mxu0 0.0
    %125 = vmatprep.subr.mxu0 0.0
    %126 = vmatpush1.msra.mxu0 0.0
    %127 = vmatprep.subr.mxu0 0.0
    %128 = vmatpush1.msra.mxu0 0.0
    %129 = vmatprep.subr.mxu0 0.0
    %130 = vmatpush1.msra.mxu0 0.0
    %131 = vmatprep.subr.mxu0 0.0
    %132 = vmatpush1.msra.mxu0 0.0
    %133 = vmatprep.subr.mxu0 0.0
    %134 = vmatpush1.msra.mxu0 0.0
    %135 = vmatprep.subr.mxu0 0.0
    %136 = vmatpush1.msra.mxu0 0.0
    %137 = vmatprep.subr.mxu0 0.0
    %138 = vmatpush1.msra.mxu0 0.0
    %139 = vmatprep.subr.mxu0 0.0
    %140 = vmatpush1.msra.mxu0 0.0
    %141 = vmatprep.subr.mxu0 0.0
    %142 = vmatpush1.msra.mxu0 0.0
    %143 = vmatprep.subr.mxu0 0.0
    %144 = vmatpush1.msra.mxu0 0.0
    %145 = vmatprep.mubr.f32.mxu0 0.0
    %146 = vmatmul.mubr.f32.gmra.mrb[0].mxu0 %v76
    %v147 = vpop.f32.mrb[0].mxu0
    %v148 = vadd.f32 %v72, %v147
    %v149 = vpop.f32.mrb[0].mxu0
    %150 = vdwg.mxu0
    %v151 = vld [vmem:[%s3] sm:$0xf]
    %v152 = vld [vmem:[%s4] sm:$0xf]
    %153 = vrot.lane.b32.xlu0 %v148, 1
    %v154 = vpop.permute.xlu0 %153
    %v155 = vmul.f32 %v154, %v52
    %156 = vrot.lane.b32.xlu0 %v148, 127
    %v157 = vpop.permute.xlu0 %156
    %v158 = vmul.f32 %v157, %v55
    %v160 = vrot.slane %v148, 4
    %v162 = vsel %vm67, %v155, %v160
    %164 = vset.pattern.permute.xlu0 0
    %165 = vperm.xlu0 %164, %v152
    %v166 = vpop.permute.xlu0 %165
    %v169 = vsel %vm74, %v151, 0
    %v172 = vsel %vm67, %v158, 0
    %174 = vmatprep.subr.mxu0 0.0
    %175 = vmatpush1.msra.mxu0 %v162
    %176 = vmatprep.subr.mxu0 0.0
    %177 = vmatpush1.msra.mxu0 %v172
    %178 = vmatprep.subr.mxu0 0.0
    %179 = vmatpush1.msra.mxu0 0.0
    %180 = vmatprep.subr.mxu0 0.0
    %181 = vmatpush1.msra.mxu0 0.0
    %182 = vmatprep.subr.mxu0 0.0
    %183 = vmatpush1.msra.mxu0 0.0
    %184 = vmatprep.subr.mxu0 0.0
    %185 = vmatpush1.msra.mxu0 0.0
    %186 = vmatprep.subr.mxu0 0.0
    %187 = vmatpush1.msra.mxu0 0.0
    %188 = vmatprep.subr.mxu0 0.0
    %189 = vmatpush1.msra.mxu0 0.0
    %190 = vmatprep.subr.mxu0 0.0
    %191 = vmatpush1.msra.mxu0 0.0
    %192 = vmatprep.subr.mxu0 0.0
    %193 = vmatpush1.msra.mxu0 0.0
    %194 = vmatprep.subr.mxu0 0.0
    %195 = vmatpush1.msra.mxu0 0.0
    %196 = vmatprep.subr.mxu0 0.0
    %197 = vmatpush1.msra.mxu0 0.0
    %198 = vmatprep.subr.mxu0 0.0
    %199 = vmatpush1.msra.mxu0 0.0
    %200 = vmatprep.subr.mxu0 0.0
    %201 = vmatpush1.msra.mxu0 0.0
    %202 = vmatprep.subr.mxu0 0.0
    %203 = vmatpush1.msra.mxu0 0.0
    %204 = vmatprep.subr.mxu0 0.0
    %205 = vmatpush1.msra.mxu0 0.0
    %206 = vmatprep.subr.mxu0 0.0
    %207 = vmatpush1.msra.mxu0 0.0
    %208 = vmatprep.subr.mxu0 0.0
    %209 = vmatpush1.msra.mxu0 0.0
    %210 = vmatprep.subr.mxu0 0.0
    %211 = vmatpush1.msra.mxu0 0.0
    %212 = vmatprep.subr.mxu0 0.0
    %213 = vmatpush1.msra.mxu0 0.0
    %214 = vmatprep.subr.mxu0 0.0
    %215 = vmatpush1.msra.mxu0 0.0
    %216 = vmatprep.subr.mxu0 0.0
    %217 = vmatpush1.msra.mxu0 0.0
    %218 = vmatprep.subr.mxu0 0.0
    %219 = vmatpush1.msra.mxu0 0.0
    %220 = vmatprep.subr.mxu0 0.0
    %221 = vmatpush1.msra.mxu0 0.0
    %222 = vmatprep.subr.mxu0 0.0
    %223 = vmatpush1.msra.mxu0 0.0
    %224 = vmatprep.subr.mxu0 0.0
    %225 = vmatpush1.msra.mxu0 0.0
    %226 = vmatprep.subr.mxu0 0.0
    %227 = vmatpush1.msra.mxu0 0.0
    %228 = vmatprep.subr.mxu0 0.0
    %229 = vmatpush1.msra.mxu0 0.0
    %230 = vmatprep.subr.mxu0 0.0
    %231 = vmatpush1.msra.mxu0 0.0
    %232 = vmatprep.subr.mxu0 0.0
    %233 = vmatpush1.msra.mxu0 0.0
    %234 = vmatprep.subr.mxu0 0.0
    %235 = vmatpush1.msra.mxu0 0.0
    %236 = vmatprep.subr.mxu0 0.0
    %237 = vmatpush1.msra.mxu0 0.0
    %238 = vmatprep.mubr.f32.mxu0 0.0
    %239 = vmatmul.mubr.f32.gmra.mrb[0].mxu0 %v169
    %v240 = vpop.f32.mrb[0].mxu0
    %v241 = vadd.f32 %v166, %v240
    %v242 = vpop.f32.mrb[0].mxu0
    %243 = vdwg.mxu0
    %v244 = vmul.f32 %v241, %v49
    %v245 = vsel %vm67, %v244, 0.0
    %246 = vadd.xlane.f32.xlu0 %v245
    %v247 = vpop.xlane.xlu0 %246
    %v248 = vmul.f32 %v247, 0.03125
    %v249 = vmul.f32 %v244, %v244
    %v250 = vsel %vm67, %v249, 0.0
    %251 = vadd.xlane.f32.xlu0 %v250
    %v252 = vpop.xlane.xlu0 %251
    %v253 = vmul.f32 %v252, 0.03125
    %v254 = vmul.f32 %v248, %v248
    %v255 = vsub.f32 %v253, %v254
    %v256 = vld [vmem:[%s5] sm:$0xf]
    %v257 = vadd.f32 %v255, 1e-05
    %v258 = vrsqrt.pop %v257
    %v259 = vmul.f32 %v256, %v258
    %v260 = vld [vmem:[%s6] sm:$0xf]
    %v261 = vmul.f32 %v248, %v259
    %v262 = vsub.f32 %v260, %v261
    %264 = vset.pattern.permute.xlu0 0
    %265 = vperm.xlu0 %264, %v259
    %v266 = vpop.permute.xlu0 %265
    %v268 = vmul.f32 %v244, %v266
    %270 = vset.pattern.permute.xlu0 0
    %271 = vperm.xlu0 %270, %v262
    %v272 = vpop.permute.xlu0 %271
    %v274 = vadd.f32 %v268, %v272
    %v275 = vsub.f32 0.0, %v274
    %v276 = vmul.f32 %v275, 1.442695
    %v277 = vpow.pop %v276
    %v278 = vadd.f32 %v277, 1.0
    %v279 = vrcp.pop %v278
    %v280 = vmul.f32 %v274, %v279
    %v281 = vld [vmem:[%s7] sm:$0xf]
    %v282 = vld [vmem:[%s8] sm:$0xf]
    %283 = vrot.lane.b32.xlu0 %v280, 1
    %v284 = vpop.permute.xlu0 %283
    %v285 = vmul.f32 %v284, %v52
    %286 = vrot.lane.b32.xlu0 %v280, 127
    %v287 = vpop.permute.xlu0 %286
    %v288 = vmul.f32 %v287, %v55
    %v290 = vrot.slane %v280, 4
    %v292 = vsel %vm67, %v285, %v290
    %294 = vset.pattern.permute.xlu0 0
    %295 = vperm.xlu0 %294, %v282
    %v296 = vpop.permute.xlu0 %295
    %v299 = vsel %vm74, %v281, 0
    %v302 = vsel %vm67, %v288, 0
    %304 = vmatprep.subr.mxu0 0.0
    %305 = vmatpush1.msra.mxu0 %v292
    %306 = vmatprep.subr.mxu0 0.0
    %307 = vmatpush1.msra.mxu0 %v302
    %308 = vmatprep.subr.mxu0 0.0
    %309 = vmatpush1.msra.mxu0 0.0
    %310 = vmatprep.subr.mxu0 0.0
    %311 = vmatpush1.msra.mxu0 0.0
    %312 = vmatprep.subr.mxu0 0.0
    %313 = vmatpush1.msra.mxu0 0.0
    %314 = vmatprep.subr.mxu0 0.0
    %315 = vmatpush1.msra.mxu0 0.0
    %316 = vmatprep.subr.mxu0 0.0
    %317 = vmatpush1.msra.mxu0 0.0
    %318 = vmatprep.subr.mxu0 0.0
    %319 = vmatpush1.msra.mxu0 0.0
    %320 = vmatprep.subr.mxu0 0.0
    %321 = vmatpush1.msra.mxu0 0.0
    %322 = vmatprep.subr.mxu0 0.0
    %323 = vmatpush1.msra.mxu0 0.0
    %324 = vmatprep.subr.mxu0 0.0
    %325 = vmatpush1.msra.mxu0 0.0
    %326 = vmatprep.subr.mxu0 0.0
    %327 = vmatpush1.msra.mxu0 0.0
    %328 = vmatprep.subr.mxu0 0.0
    %329 = vmatpush1.msra.mxu0 0.0
    %330 = vmatprep.subr.mxu0 0.0
    %331 = vmatpush1.msra.mxu0 0.0
    %332 = vmatprep.subr.mxu0 0.0
    %333 = vmatpush1.msra.mxu0 0.0
    %334 = vmatprep.subr.mxu0 0.0
    %335 = vmatpush1.msra.mxu0 0.0
    %336 = vmatprep.subr.mxu0 0.0
    %337 = vmatpush1.msra.mxu0 0.0
    %338 = vmatprep.subr.mxu0 0.0
    %339 = vmatpush1.msra.mxu0 0.0
    %340 = vmatprep.subr.mxu0 0.0
    %341 = vmatpush1.msra.mxu0 0.0
    %342 = vmatprep.subr.mxu0 0.0
    %343 = vmatpush1.msra.mxu0 0.0
    %344 = vmatprep.subr.mxu0 0.0
    %345 = vmatpush1.msra.mxu0 0.0
    %346 = vmatprep.subr.mxu0 0.0
    %347 = vmatpush1.msra.mxu0 0.0
    %348 = vmatprep.subr.mxu0 0.0
    %349 = vmatpush1.msra.mxu0 0.0
    %350 = vmatprep.subr.mxu0 0.0
    %351 = vmatpush1.msra.mxu0 0.0
    %352 = vmatprep.subr.mxu0 0.0
    %353 = vmatpush1.msra.mxu0 0.0
    %354 = vmatprep.subr.mxu0 0.0
    %355 = vmatpush1.msra.mxu0 0.0
    %356 = vmatprep.subr.mxu0 0.0
    %357 = vmatpush1.msra.mxu0 0.0
    %358 = vmatprep.subr.mxu0 0.0
    %359 = vmatpush1.msra.mxu0 0.0
    %360 = vmatprep.subr.mxu0 0.0
    %361 = vmatpush1.msra.mxu0 0.0
    %362 = vmatprep.subr.mxu0 0.0
    %363 = vmatpush1.msra.mxu0 0.0
    %364 = vmatprep.subr.mxu0 0.0
    %365 = vmatpush1.msra.mxu0 0.0
    %366 = vmatprep.subr.mxu0 0.0
    %367 = vmatpush1.msra.mxu0 0.0
    %368 = vmatprep.mubr.f32.mxu0 0.0
    %369 = vmatmul.mubr.f32.gmra.mrb[0].mxu0 %v299
    %v370 = vpop.f32.mrb[0].mxu0
    %v371 = vadd.f32 %v296, %v370
    %v372 = vpop.f32.mrb[0].mxu0
    %373 = vdwg.mxu0
    %v374 = vmul.f32 %v371, 0.1
    %v375 = vadd.f32 %v33, %v374
    %376 = vst [vmem:[#allocation2] sm:$0xf] %v375
    // Predicated region
    $region38: #{tpu_custom_call.1} parent=1 // pred_check
      _
    $region39: #{tpu_custom_call.1} parent=1 // pred_check_branch
      %378 = sbr.rel (0) target = $region41
    $region40: #{tpu_custom_call.1} parent=1 // pred_region
      %s380 = ssub.s32 64, 64
      %381 = vsyncadd [#allocation3], %s380
      %s383 = sshll.u32 [#allocation2], 4
      %s384 = int_to_ptr.vmem [resolvable:$true] %s383
      %386 = dma.vmem_to_hbm [thread:$0]  %s384, 64, %s9, [#allocation3]
    $region41: #{tpu_custom_call.1} parent=1 // pred_fallthru
      _
    // Predicated region
    $region42: #{tpu_custom_call.1} parent=1 // pred_check
      _
    $region43: #{tpu_custom_call.1} parent=1 // pred_check_branch
      %388 = sbr.rel (0) target = $region45
    $region44: #{tpu_custom_call.1} parent=1 // pred_region
      %389 = dma.done [#allocation3], 64
    $region45: #{tpu_custom_call.1} parent=1 // pred_fallthru
      _
    %390 = vsyncpa [#allocation3], 1

</llo_original>
